<compile_context>
chip_gen: v7x
topology: tpu7x:2x2x1
jax: 0.10.0
libtpu: 0.0.40
codegen_flags: <defaults>
</compile_context>

<pallas_src>
import functools
import math

import jax
import jax.numpy as jnp
from jax.experimental import pallas as pl
from jax.experimental.pallas import tpu as pltpu

E_CONST = 2.71828            # nn.Parameter(torch.ones(1) * 2.71828)
PI_CONST = 3.1415926         # nn.Parameter(torch.ones(1) * 3.1415926)
NEG_HALF_LN_E = -0.5 * math.log(E_CONST)   # e.pow(-index/2) == exp(-index/2 * ln e)


# --------------------------------------------------------------------------
# Fused kernel: GMM stack + clamp + ImageNet norm + linear classifier head.
# --------------------------------------------------------------------------
def gmm_fused_kernel(lp_ref, x_ref, xs_ref, ys_ref, mean_ref, istd_ref,
                     w_ref, b_ref,
                     pert_ref, out_ref, norm_ref, pred_ref,
                     *, num_layers):
    # lp_ref   : SMEM (G, 9) -> [cos, sin, S1*10, S2*10, mu_x, mu_y,
    #                            1/(Sx^2+1e-6), 1/(Sy^2+1e-6),
    #                            |1/(2*pi*Sx*Sy+1e-6)| * pert_scale/255 * p]
    # x_ref    : VMEM (C, HW)   image, channel-major flat spatial (lane-dense)
    # xs_ref   : VMEM (1, HW)   flattened linspace grid (varies along columns)
    # ys_ref   : VMEM (1, HW)   flattened linspace grid (varies along rows)
    # mean_ref : VMEM (C, 1)
    # istd_ref : VMEM (C, 1)    1/std
    # w_ref    : VMEM (C, HW, NPAD) zero-padded classifier weights
    # b_ref    : VMEM (1, NPAD)     zero-padded classifier bias
    # outputs  : pert (1, HW), out (C, HW), norm (C, HW), pred (1, NPAD)
    xs = xs_ref[...]                          # (1, HW)
    ys = ys_ref[...]                          # (1, HW)

    out = x_ref[...]                          # (C, HW)
    pert_acc = jnp.zeros_like(xs)             # (1, HW)

    for i in range(num_layers):               # static unroll, G is small
        cos = lp_ref[i, 0]
        sin = lp_ref[i, 1]
        s1 = lp_ref[i, 2]
        s2 = lp_ref[i, 3]
        mux = lp_ref[i, 4]
        muy = lp_ref[i, 5]
        inv_sx2 = lp_ref[i, 6]
        inv_sy2 = lp_ref[i, 7]
        coef = lp_ref[i, 8]

        # rotate(x, y, cos)
        xg = xs - mux
        yg = ys - muy
        xn = cos * xg + sin * yg + mux
        yn = cos * yg - sin * xg + muy

        # get_func: scale, Gaussian index (reciprocals precomputed)
        dx = xn * s1 - mux
        dy = yn * s2 - muy
        index = dx * dx * inv_sx2 + dy * dy * inv_sy2

        # ratio * e^(-index/2) * pert_scale/255 * p, all constants folded in coef
        pert_layer = coef * jnp.exp(NEG_HALF_LN_E * index)     # (1, HW)

        pert_acc = pert_acc + pert_layer
        out = jnp.clip(out + pert_layer, 0.0, 1.0)             # broadcast over C

    pert_ref[...] = pert_acc
    out_ref[...] = out

    # norm_img: (out - mean) * (1/std), single vectorized (C, HW) op
    norm = (out - mean_ref[...]) * istd_ref[...]
    norm_ref[...] = norm

    # Fused linear head: sum_c norm[c,:] @ W[c]  ==  flat(norm) @ W_flat
    acc = jnp.dot(norm[0:1, :], w_ref[0], preferred_element_type=jnp.float32)
    for c in range(1, norm.shape[0]):
        acc = acc + jnp.dot(norm[c:c + 1, :], w_ref[c],
                            preferred_element_type=jnp.float32)
    pred_ref[...] = acc + b_ref[...]


# --------------------------------------------------------------------------
# Wrapper: param packing, lane-dense layout plumbing, single pallas_call.
# --------------------------------------------------------------------------
def gmm_network_forward(x, params, mean, std, fc_w, fc_b, pert_scale):
    B, C, H, W = x.shape
    G = params.shape[0]
    assert B == 1, "original module's broadcasting is only valid for batch_size=1"
    assert H == W, "original pert_maker only valid for square images"
    HW = H * W
    NPAD = 128                               # pad classifier out-dim to a lane tile

    # Hoisted per-layer scalar derivations (sqrt, reciprocals, ratio, scale).
    S1, S2, Sx, Sy, mux, muy, R, p = [params[:, k] for k in range(8)]
    sinR = jnp.sqrt(1.0 - R * R)
    ratio = jnp.abs(1.0 / (2.0 * PI_CONST * Sx * Sy + 1e-6))
    coef = ratio * (float(pert_scale) / 255.0) * p
    lp = jnp.stack(
        [R, sinR, S1 * 10.0, S2 * 10.0, mux, muy,
         1.0 / (Sx * Sx + 1e-6), 1.0 / (Sy * Sy + 1e-6), coef],
        axis=1).astype(jnp.float32)                                   # (G, 9)

    # Lane-dense data layout: (C, HW) image, (1, HW) coordinate grids.
    x_flat = x.reshape(C, HW).astype(jnp.float32)
    lin_h = jnp.linspace(-1.0, 1.0, H, dtype=jnp.float32)
    lin_w = jnp.linspace(-1.0, 1.0, W, dtype=jnp.float32)
    xs = jnp.tile(lin_h[None, :], (H, 1)).reshape(1, HW)     # varies along cols
    ys = jnp.tile(lin_w[:, None], (1, W)).reshape(1, HW)     # varies along rows

    mean_col = mean.reshape(C, 1).astype(jnp.float32)
    istd_col = (1.0 / std).reshape(C, 1).astype(jnp.float32)

    # Zero-pad the classifier head to 128 output lanes, channel-split weights.
    n_cls = fc_w.shape[1]
    w_pad = jnp.zeros((C * HW, NPAD), jnp.float32).at[:, :n_cls].set(fc_w)
    w_pad = w_pad.reshape(C, HW, NPAD)
    b_pad = jnp.zeros((1, NPAD), jnp.float32).at[:, :n_cls].set(fc_b)

    kernel = functools.partial(gmm_fused_kernel, num_layers=G)

    pert, out, out_norm, pred_pad = pl.pallas_call(
        kernel,
        out_shape=(
            jax.ShapeDtypeStruct((1, HW), jnp.float32),
            jax.ShapeDtypeStruct((C, HW), jnp.float32),
            jax.ShapeDtypeStruct((C, HW), jnp.float32),
            jax.ShapeDtypeStruct((1, NPAD), jnp.float32),
        ),
        in_specs=[
            pl.BlockSpec(memory_space=pltpu.MemorySpace.SMEM),   # lp (G, 9)
            pl.BlockSpec(memory_space=pltpu.MemorySpace.VMEM),   # x_flat
            pl.BlockSpec(memory_space=pltpu.MemorySpace.VMEM),   # xs
            pl.BlockSpec(memory_space=pltpu.MemorySpace.VMEM),   # ys
            pl.BlockSpec(memory_space=pltpu.MemorySpace.VMEM),   # mean_col
            pl.BlockSpec(memory_space=pltpu.MemorySpace.VMEM),   # istd_col
            pl.BlockSpec(memory_space=pltpu.MemorySpace.VMEM),   # w_pad
            pl.BlockSpec(memory_space=pltpu.MemorySpace.VMEM),   # b_pad
        ],
        out_specs=(pl.BlockSpec(memory_space=pltpu.MemorySpace.VMEM),) * 4,
    )(lp, x_flat, xs, ys, mean_col, istd_col, w_pad, b_pad)

    # Free, contiguous reshapes back to NCHW; slice off the lane padding.
    pred = pred_pad[:, :n_cls]
    pert = pert.reshape(B, 1, H, W)
    out = out.reshape(B, C, H, W)
    out_norm = out_norm.reshape(B, C, H, W)
    return pred, pert, out, out_norm


# --------------------------------------------------------------------------
# Pure-JAX reference (correctness check, mirrors the PyTorch math).
# --------------------------------------------------------------------------
def reference_forward(x, params, mean, std, fc_w, fc_b, pert_scale):
    B, C, H, W = x.shape
    ps = float(pert_scale) / 255.0
    lin_h = jnp.linspace(-1.0, 1.0, H)
    lin_w = jnp.linspace(-1.0, 1.0, W)
    xs = jnp.broadcast_to(lin_h[None, :], (H, W))
    ys = jnp.broadcast_to(lin_w[:, None], (H, W))

    out = x
    pert_acc = jnp.zeros((B, 1, H, W), jnp.float32)
    for i in range(params.shape[0]):
        S1, S2, Sx, Sy, mux, muy, Rc, p = [params[i, k] for k in range(8)]
        sin = jnp.sqrt(1.0 - Rc * Rc)
        xn = Rc * (xs - mux) + sin * (ys - muy) + mux
        yn = -sin * (xs - mux) + Rc * (ys - muy) + muy
        x2 = xn * S1 * 10.0
        y2 = yn * S2 * 10.0
        index = (x2 - mux) ** 2 / (Sx * Sx + 1e-6) + (y2 - muy) ** 2 / (Sy * Sy + 1e-6)
        ratio = jnp.abs(1.0 / (2.0 * PI_CONST * Sx * Sy + 1e-6))
        g = ratio * jnp.exp(index * (-0.5 * math.log(E_CONST)))
        pert_layer = (g * ps * p)[None, None, :, :]
        pert_acc = pert_acc + pert_layer
        out = jnp.clip(out + pert_layer, 0.0, 1.0)

    out_norm = (out - mean.reshape(1, 3, 1, 1)) / std.reshape(1, 3, 1, 1)
    pred = out_norm.reshape(B, -1) @ fc_w + fc_b
    return pred, pert_acc, out, out_norm


if __name__ == "__main__":
    key = jax.random.PRNGKey(0)
    k_x, k_w, k_b = jax.random.split(key, 3)

    B, C, H, W = 1, 3, 16, 16
    G = 3                                   # Gaussian_number
    num_classes = 10
    pert_scale = 16.0

    # Deterministic parameters, matching GMM.__init__ (batch_size = 1):
    #   S1 = S2 = 0.1, S_x = S_y = 1, R = 0, plus per-layer mu_x, mu_y, p.
    mu_x = [0.0, 0.5, -0.5]
    mu_y = [0.0, -0.5, 0.5]
    p_vals = [1.0, 0.8, 1.2]
    params = jnp.array(
        [[0.1, 0.1, 1.0, 1.0, mu_x[i], mu_y[i], 0.0, p_vals[i]] for i in range(G)],
        dtype=jnp.float32,
    )                                        # (G, 8)

    mean = jnp.array([0.485, 0.456, 0.406], jnp.float32)
    std = jnp.array([0.229, 0.224, 0.225], jnp.float32)

    # TODO(synk): the original target_model is an external module; substituted
    # here with a deterministic linear classifier head (fused into the kernel).
    fc_w = jax.random.normal(k_w, (C * H * W, num_classes), jnp.float32) * 0.02
    fc_b = jax.random.normal(k_b, (1, num_classes), jnp.float32) * 0.01

    x = jax.random.uniform(k_x, (B, C, H, W), jnp.float32)   # image in [0, 1]

    pred, pert, out, out_norm = gmm_network_forward(
        x, params, mean, std, fc_w, fc_b, pert_scale)
    jax.block_until_ready((pred, pert, out, out_norm))

    pred_r, pert_r, out_r, norm_r = reference_forward(
        x, params, mean, std, fc_w, fc_b, pert_scale)

    assert jnp.allclose(pert, pert_r, atol=1e-5, rtol=1e-4)
    assert jnp.allclose(out, out_r, atol=1e-5, rtol=1e-4)
    assert jnp.allclose(out_norm, norm_r, atol=1e-4, rtol=1e-4)
    assert jnp.allclose(pred, pred_r, atol=1e-3, rtol=1e-3)

    print("KERNEL_OK")
</pallas_src>

<mosaic_0001>
module attributes {stable_mosaic.version = 11 : i64} {
  func.func @gmm_fused_kernel(%arg0: memref<3x9xf32, #tpu.memory_space<smem>>, %arg1: memref<3x256xf32, #tpu.memory_space<vmem>>, %arg2: memref<1x256xf32, #tpu.memory_space<vmem>>, %arg3: memref<1x256xf32, #tpu.memory_space<vmem>>, %arg4: memref<3x1xf32, #tpu.memory_space<vmem>>, %arg5: memref<3x1xf32, #tpu.memory_space<vmem>>, %arg6: memref<3x256x128xf32, #tpu.memory_space<vmem>>, %arg7: memref<1x128xf32, #tpu.memory_space<vmem>>, %arg8: memref<1x256xf32, #tpu.memory_space<vmem>>, %arg9: memref<3x256xf32, #tpu.memory_space<vmem>>, %arg10: memref<3x256xf32, #tpu.memory_space<vmem>>, %arg11: memref<1x128xf32, #tpu.memory_space<vmem>>) attributes {dimension_semantics = [], scalar_prefetch = 0 : i64, scratch_operands = 0 : i64, tpu.core_type = #tpu.core_type<tc>} {
    %c0 = arith.constant 0 : index
    %c0_0 = arith.constant 0 : index
    %0 = vector.load %arg2[%c0, %c0_0] : memref<1x256xf32, #tpu.memory_space<vmem>>, vector<1x256xf32>
    %c0_1 = arith.constant 0 : index
    %c0_2 = arith.constant 0 : index
    %1 = vector.load %arg3[%c0_1, %c0_2] : memref<1x256xf32, #tpu.memory_space<vmem>>, vector<1x256xf32>
    %c0_3 = arith.constant 0 : index
    %c0_4 = arith.constant 0 : index
    %2 = vector.load %arg1[%c0_3, %c0_4] : memref<3x256xf32, #tpu.memory_space<vmem>>, vector<3x256xf32>
    %cst = arith.constant 0.000000e+00 : f32
    %3 = vector.broadcast %cst : f32 to vector<1x256xf32>
    %c0_5 = arith.constant 0 : index
    %c0_6 = arith.constant 0 : index
    %4 = memref.load %arg0[%c0_5, %c0_6] : memref<3x9xf32, #tpu.memory_space<smem>>
    %c0_7 = arith.constant 0 : index
    %c1 = arith.constant 1 : index
    %5 = memref.load %arg0[%c0_7, %c1] : memref<3x9xf32, #tpu.memory_space<smem>>
    %c0_8 = arith.constant 0 : index
    %c2 = arith.constant 2 : index
    %6 = memref.load %arg0[%c0_8, %c2] : memref<3x9xf32, #tpu.memory_space<smem>>
    %c0_9 = arith.constant 0 : index
    %c3 = arith.constant 3 : index
    %7 = memref.load %arg0[%c0_9, %c3] : memref<3x9xf32, #tpu.memory_space<smem>>
    %c0_10 = arith.constant 0 : index
    %c4 = arith.constant 4 : index
    %8 = memref.load %arg0[%c0_10, %c4] : memref<3x9xf32, #tpu.memory_space<smem>>
    %c0_11 = arith.constant 0 : index
    %c5 = arith.constant 5 : index
    %9 = memref.load %arg0[%c0_11, %c5] : memref<3x9xf32, #tpu.memory_space<smem>>
    %c0_12 = arith.constant 0 : index
    %c6 = arith.constant 6 : index
    %10 = memref.load %arg0[%c0_12, %c6] : memref<3x9xf32, #tpu.memory_space<smem>>
    %c0_13 = arith.constant 0 : index
    %c7 = arith.constant 7 : index
    %11 = memref.load %arg0[%c0_13, %c7] : memref<3x9xf32, #tpu.memory_space<smem>>
    %c0_14 = arith.constant 0 : index
    %c8 = arith.constant 8 : index
    %12 = memref.load %arg0[%c0_14, %c8] : memref<3x9xf32, #tpu.memory_space<smem>>
    %13 = vector.broadcast %8 : f32 to vector<1x256xf32>
    %14 = arith.subf %0, %13 : vector<1x256xf32>
    %15 = vector.broadcast %9 : f32 to vector<1x256xf32>
    %16 = arith.subf %1, %15 : vector<1x256xf32>
    %17 = vector.broadcast %4 : f32 to vector<1x256xf32>
    %18 = arith.mulf %17, %14 : vector<1x256xf32>
    %19 = vector.broadcast %5 : f32 to vector<1x256xf32>
    %20 = arith.mulf %19, %16 : vector<1x256xf32>
    %21 = arith.addf %18, %20 : vector<1x256xf32>
    %22 = vector.broadcast %8 : f32 to vector<1x256xf32>
    %23 = arith.addf %21, %22 : vector<1x256xf32>
    %24 = vector.broadcast %4 : f32 to vector<1x256xf32>
    %25 = arith.mulf %24, %16 : vector<1x256xf32>
    %26 = vector.broadcast %5 : f32 to vector<1x256xf32>
    %27 = arith.mulf %26, %14 : vector<1x256xf32>
    %28 = arith.subf %25, %27 : vector<1x256xf32>
    %29 = vector.broadcast %9 : f32 to vector<1x256xf32>
    %30 = arith.addf %28, %29 : vector<1x256xf32>
    %31 = vector.broadcast %6 : f32 to vector<1x256xf32>
    %32 = arith.mulf %23, %31 : vector<1x256xf32>
    %33 = vector.broadcast %8 : f32 to vector<1x256xf32>
    %34 = arith.subf %32, %33 : vector<1x256xf32>
    %35 = vector.broadcast %7 : f32 to vector<1x256xf32>
    %36 = arith.mulf %30, %35 : vector<1x256xf32>
    %37 = vector.broadcast %9 : f32 to vector<1x256xf32>
    %38 = arith.subf %36, %37 : vector<1x256xf32>
    %39 = arith.mulf %34, %34 : vector<1x256xf32>
    %40 = vector.broadcast %10 : f32 to vector<1x256xf32>
    %41 = arith.mulf %39, %40 : vector<1x256xf32>
    %42 = arith.mulf %38, %38 : vector<1x256xf32>
    %43 = vector.broadcast %11 : f32 to vector<1x256xf32>
    %44 = arith.mulf %42, %43 : vector<1x256xf32>
    %45 = arith.addf %41, %44 : vector<1x256xf32>
    %cst_15 = arith.constant -0.499999672 : f32
    %46 = vector.broadcast %cst_15 : f32 to vector<1x256xf32>
    %47 = arith.mulf %46, %45 : vector<1x256xf32>
    %48 = math.exp %47 : vector<1x256xf32>
    %49 = vector.broadcast %12 : f32 to vector<1x256xf32>
    %50 = arith.mulf %49, %48 : vector<1x256xf32>
    %51 = arith.addf %3, %50 : vector<1x256xf32>
    %52 = vector.broadcast %50 : vector<1x256xf32> to vector<3x256xf32>
    %53 = arith.addf %2, %52 : vector<3x256xf32>
    %cst_16 = arith.constant 0.000000e+00 : f32
    %cst_17 = arith.constant 1.000000e+00 : f32
    %54 = vector.broadcast %cst_16 : f32 to vector<3x256xf32>
    %55 = arith.maximumf %54, %53 : vector<3x256xf32>
    %56 = vector.broadcast %cst_17 : f32 to vector<3x256xf32>
    %57 = arith.minimumf %56, %55 : vector<3x256xf32>
    %c1_18 = arith.constant 1 : index
    %c0_19 = arith.constant 0 : index
    %58 = memref.load %arg0[%c1_18, %c0_19] : memref<3x9xf32, #tpu.memory_space<smem>>
    %c1_20 = arith.constant 1 : index
    %c1_21 = arith.constant 1 : index
    %59 = memref.load %arg0[%c1_20, %c1_21] : memref<3x9xf32, #tpu.memory_space<smem>>
    %c1_22 = arith.constant 1 : index
    %c2_23 = arith.constant 2 : index
    %60 = memref.load %arg0[%c1_22, %c2_23] : memref<3x9xf32, #tpu.memory_space<smem>>
    %c1_24 = arith.constant 1 : index
    %c3_25 = arith.constant 3 : index
    %61 = memref.load %arg0[%c1_24, %c3_25] : memref<3x9xf32, #tpu.memory_space<smem>>
    %c1_26 = arith.constant 1 : index
    %c4_27 = arith.constant 4 : index
    %62 = memref.load %arg0[%c1_26, %c4_27] : memref<3x9xf32, #tpu.memory_space<smem>>
    %c1_28 = arith.constant 1 : index
    %c5_29 = arith.constant 5 : index
    %63 = memref.load %arg0[%c1_28, %c5_29] : memref<3x9xf32, #tpu.memory_space<smem>>
    %c1_30 = arith.constant 1 : index
    %c6_31 = arith.constant 6 : index
    %64 = memref.load %arg0[%c1_30, %c6_31] : memref<3x9xf32, #tpu.memory_space<smem>>
    %c1_32 = arith.constant 1 : index
    %c7_33 = arith.constant 7 : index
    %65 = memref.load %arg0[%c1_32, %c7_33] : memref<3x9xf32, #tpu.memory_space<smem>>
    %c1_34 = arith.constant 1 : index
    %c8_35 = arith.constant 8 : index
    %66 = memref.load %arg0[%c1_34, %c8_35] : memref<3x9xf32, #tpu.memory_space<smem>>
    %67 = vector.broadcast %62 : f32 to vector<1x256xf32>
    %68 = arith.subf %0, %67 : vector<1x256xf32>
    %69 = vector.broadcast %63 : f32 to vector<1x256xf32>
    %70 = arith.subf %1, %69 : vector<1x256xf32>
    %71 = vector.broadcast %58 : f32 to vector<1x256xf32>
    %72 = arith.mulf %71, %68 : vector<1x256xf32>
    %73 = vector.broadcast %59 : f32 to vector<1x256xf32>
    %74 = arith.mulf %73, %70 : vector<1x256xf32>
    %75 = arith.addf %72, %74 : vector<1x256xf32>
    %76 = vector.broadcast %62 : f32 to vector<1x256xf32>
    %77 = arith.addf %75, %76 : vector<1x256xf32>
    %78 = vector.broadcast %58 : f32 to vector<1x256xf32>
    %79 = arith.mulf %78, %70 : vector<1x256xf32>
    %80 = vector.broadcast %59 : f32 to vector<1x256xf32>
    %81 = arith.mulf %80, %68 : vector<1x256xf32>
    %82 = arith.subf %79, %81 : vector<1x256xf32>
    %83 = vector.broadcast %63 : f32 to vector<1x256xf32>
    %84 = arith.addf %82, %83 : vector<1x256xf32>
    %85 = vector.broadcast %60 : f32 to vector<1x256xf32>
    %86 = arith.mulf %77, %85 : vector<1x256xf32>
    %87 = vector.broadcast %62 : f32 to vector<1x256xf32>
    %88 = arith.subf %86, %87 : vector<1x256xf32>
    %89 = vector.broadcast %61 : f32 to vector<1x256xf32>
    %90 = arith.mulf %84, %89 : vector<1x256xf32>
    %91 = vector.broadcast %63 : f32 to vector<1x256xf32>
    %92 = arith.subf %90, %91 : vector<1x256xf32>
    %93 = arith.mulf %88, %88 : vector<1x256xf32>
    %94 = vector.broadcast %64 : f32 to vector<1x256xf32>
    %95 = arith.mulf %93, %94 : vector<1x256xf32>
    %96 = arith.mulf %92, %92 : vector<1x256xf32>
    %97 = vector.broadcast %65 : f32 to vector<1x256xf32>
    %98 = arith.mulf %96, %97 : vector<1x256xf32>
    %99 = arith.addf %95, %98 : vector<1x256xf32>
    %cst_36 = arith.constant -0.499999672 : f32
    %100 = vector.broadcast %cst_36 : f32 to vector<1x256xf32>
    %101 = arith.mulf %100, %99 : vector<1x256xf32>
    %102 = math.exp %101 : vector<1x256xf32>
    %103 = vector.broadcast %66 : f32 to vector<1x256xf32>
    %104 = arith.mulf %103, %102 : vector<1x256xf32>
    %105 = arith.addf %51, %104 : vector<1x256xf32>
    %106 = vector.broadcast %104 : vector<1x256xf32> to vector<3x256xf32>
    %107 = arith.addf %57, %106 : vector<3x256xf32>
    %cst_37 = arith.constant 0.000000e+00 : f32
    %cst_38 = arith.constant 1.000000e+00 : f32
    %108 = vector.broadcast %cst_37 : f32 to vector<3x256xf32>
    %109 = arith.maximumf %108, %107 : vector<3x256xf32>
    %110 = vector.broadcast %cst_38 : f32 to vector<3x256xf32>
    %111 = arith.minimumf %110, %109 : vector<3x256xf32>
    %c2_39 = arith.constant 2 : index
    %c0_40 = arith.constant 0 : index
    %112 = memref.load %arg0[%c2_39, %c0_40] : memref<3x9xf32, #tpu.memory_space<smem>>
    %c2_41 = arith.constant 2 : index
    %c1_42 = arith.constant 1 : index
    %113 = memref.load %arg0[%c2_41, %c1_42] : memref<3x9xf32, #tpu.memory_space<smem>>
    %c2_43 = arith.constant 2 : index
    %c2_44 = arith.constant 2 : index
    %114 = memref.load %arg0[%c2_43, %c2_44] : memref<3x9xf32, #tpu.memory_space<smem>>
    %c2_45 = arith.constant 2 : index
    %c3_46 = arith.constant 3 : index
    %115 = memref.load %arg0[%c2_45, %c3_46] : memref<3x9xf32, #tpu.memory_space<smem>>
    %c2_47 = arith.constant 2 : index
    %c4_48 = arith.constant 4 : index
    %116 = memref.load %arg0[%c2_47, %c4_48] : memref<3x9xf32, #tpu.memory_space<smem>>
    %c2_49 = arith.constant 2 : index
    %c5_50 = arith.constant 5 : index
    %117 = memref.load %arg0[%c2_49, %c5_50] : memref<3x9xf32, #tpu.memory_space<smem>>
    %c2_51 = arith.constant 2 : index
    %c6_52 = arith.constant 6 : index
    %118 = memref.load %arg0[%c2_51, %c6_52] : memref<3x9xf32, #tpu.memory_space<smem>>
    %c2_53 = arith.constant 2 : index
    %c7_54 = arith.constant 7 : index
    %119 = memref.load %arg0[%c2_53, %c7_54] : memref<3x9xf32, #tpu.memory_space<smem>>
    %c2_55 = arith.constant 2 : index
    %c8_56 = arith.constant 8 : index
    %120 = memref.load %arg0[%c2_55, %c8_56] : memref<3x9xf32, #tpu.memory_space<smem>>
    %121 = vector.broadcast %116 : f32 to vector<1x256xf32>
    %122 = arith.subf %0, %121 : vector<1x256xf32>
    %123 = vector.broadcast %117 : f32 to vector<1x256xf32>
    %124 = arith.subf %1, %123 : vector<1x256xf32>
    %125 = vector.broadcast %112 : f32 to vector<1x256xf32>
    %126 = arith.mulf %125, %122 : vector<1x256xf32>
    %127 = vector.broadcast %113 : f32 to vector<1x256xf32>
    %128 = arith.mulf %127, %124 : vector<1x256xf32>
    %129 = arith.addf %126, %128 : vector<1x256xf32>
    %130 = vector.broadcast %116 : f32 to vector<1x256xf32>
    %131 = arith.addf %129, %130 : vector<1x256xf32>
    %132 = vector.broadcast %112 : f32 to vector<1x256xf32>
    %133 = arith.mulf %132, %124 : vector<1x256xf32>
    %134 = vector.broadcast %113 : f32 to vector<1x256xf32>
    %135 = arith.mulf %134, %122 : vector<1x256xf32>
    %136 = arith.subf %133, %135 : vector<1x256xf32>
    %137 = vector.broadcast %117 : f32 to vector<1x256xf32>
    %138 = arith.addf %136, %137 : vector<1x256xf32>
    %139 = vector.broadcast %114 : f32 to vector<1x256xf32>
    %140 = arith.mulf %131, %139 : vector<1x256xf32>
    %141 = vector.broadcast %116 : f32 to vector<1x256xf32>
    %142 = arith.subf %140, %141 : vector<1x256xf32>
    %143 = vector.broadcast %115 : f32 to vector<1x256xf32>
    %144 = arith.mulf %138, %143 : vector<1x256xf32>
    %145 = vector.broadcast %117 : f32 to vector<1x256xf32>
    %146 = arith.subf %144, %145 : vector<1x256xf32>
    %147 = arith.mulf %142, %142 : vector<1x256xf32>
    %148 = vector.broadcast %118 : f32 to vector<1x256xf32>
    %149 = arith.mulf %147, %148 : vector<1x256xf32>
    %150 = arith.mulf %146, %146 : vector<1x256xf32>
    %151 = vector.broadcast %119 : f32 to vector<1x256xf32>
    %152 = arith.mulf %150, %151 : vector<1x256xf32>
    %153 = arith.addf %149, %152 : vector<1x256xf32>
    %cst_57 = arith.constant -0.499999672 : f32
    %154 = vector.broadcast %cst_57 : f32 to vector<1x256xf32>
    %155 = arith.mulf %154, %153 : vector<1x256xf32>
    %156 = math.exp %155 : vector<1x256xf32>
    %157 = vector.broadcast %120 : f32 to vector<1x256xf32>
    %158 = arith.mulf %157, %156 : vector<1x256xf32>
    %159 = arith.addf %105, %158 : vector<1x256xf32>
    %160 = vector.broadcast %158 : vector<1x256xf32> to vector<3x256xf32>
    %161 = arith.addf %111, %160 : vector<3x256xf32>
    %cst_58 = arith.constant 0.000000e+00 : f32
    %cst_59 = arith.constant 1.000000e+00 : f32
    %162 = vector.broadcast %cst_58 : f32 to vector<3x256xf32>
    %163 = arith.maximumf %162, %161 : vector<3x256xf32>
    %164 = vector.broadcast %cst_59 : f32 to vector<3x256xf32>
    %165 = arith.minimumf %164, %163 : vector<3x256xf32>
    %c0_60 = arith.constant 0 : index
    %c0_61 = arith.constant 0 : index
    %166 = vector.load %arg8[%c0_60, %c0_61] : memref<1x256xf32, #tpu.memory_space<vmem>>, vector<1x256xf32>
    tpu.vector_store %arg8[%c0_60, %c0_61], %159 {strides = array<i32>} : memref<1x256xf32, #tpu.memory_space<vmem>>, vector<1x256xf32>,
    %c0_62 = arith.constant 0 : index
    %c0_63 = arith.constant 0 : index
    %167 = vector.load %arg9[%c0_62, %c0_63] : memref<3x256xf32, #tpu.memory_space<vmem>>, vector<3x256xf32>
    tpu.vector_store %arg9[%c0_62, %c0_63], %165 {strides = array<i32>} : memref<3x256xf32, #tpu.memory_space<vmem>>, vector<3x256xf32>,
    %c0_64 = arith.constant 0 : index
    %c0_65 = arith.constant 0 : index
    %168 = vector.load %arg4[%c0_64, %c0_65] : memref<3x1xf32, #tpu.memory_space<vmem>>, vector<3x1xf32>
    %169 = vector.broadcast %168 : vector<3x1xf32> to vector<3x256xf32>
    %170 = arith.subf %165, %169 : vector<3x256xf32>
    %c0_66 = arith.constant 0 : index
    %c0_67 = arith.constant 0 : index
    %171 = vector.load %arg5[%c0_66, %c0_67] : memref<3x1xf32, #tpu.memory_space<vmem>>, vector<3x1xf32>
    %172 = vector.broadcast %171 : vector<3x1xf32> to vector<3x256xf32>
    %173 = arith.mulf %170, %172 : vector<3x256xf32>
    %c0_68 = arith.constant 0 : index
    %c0_69 = arith.constant 0 : index
    %174 = vector.load %arg10[%c0_68, %c0_69] : memref<3x256xf32, #tpu.memory_space<vmem>>, vector<3x256xf32>
    tpu.vector_store %arg10[%c0_68, %c0_69], %173 {strides = array<i32>} : memref<3x256xf32, #tpu.memory_space<vmem>>, vector<3x256xf32>,
    %175 = vector.extract_strided_slice %173 {offsets = [0, 0], sizes = [1, 256], strides = [1, 1]} : vector<3x256xf32> to vector<1x256xf32>
    %c0_70 = arith.constant 0 : index
    %c0_71 = arith.constant 0 : index
    %c0_72 = arith.constant 0 : index
    %176 = vector.load %arg6[%c0_70, %c0_71, %c0_72] : memref<3x256x128xf32, #tpu.memory_space<vmem>>, vector<1x256x128xf32>
    %177 = vector.shape_cast %176 : vector<1x256x128xf32> to vector<256x128xf32>
    %cst_73 = arith.constant dense<0.000000e+00> : vector<1x128xf32>
    %178 = tpu.matmul %175, %177, %cst_73 {dimension_numbers = #tpu.dot_dimension_numbers<[1], [0], [0], [1], [0, 0, 1, 1], [], []>} : vector<1x256xf32>, vector<256x128xf32>, vector<1x128xf32> -> vector<1x128xf32>
    %179 = vector.extract_strided_slice %173 {offsets = [1, 0], sizes = [1, 256], strides = [1, 1]} : vector<3x256xf32> to vector<1x256xf32>
    %c1_74 = arith.constant 1 : index
    %c0_75 = arith.constant 0 : index
    %c0_76 = arith.constant 0 : index
    %180 = vector.load %arg6[%c1_74, %c0_75, %c0_76] : memref<3x256x128xf32, #tpu.memory_space<vmem>>, vector<1x256x128xf32>
    %181 = vector.shape_cast %180 : vector<1x256x128xf32> to vector<256x128xf32>
    %cst_77 = arith.constant dense<0.000000e+00> : vector<1x128xf32>
    %182 = tpu.matmul %179, %181, %cst_77 {dimension_numbers = #tpu.dot_dimension_numbers<[1], [0], [0], [1], [0, 0, 1, 1], [], []>} : vector<1x256xf32>, vector<256x128xf32>, vector<1x128xf32> -> vector<1x128xf32>
    %183 = arith.addf %178, %182 : vector<1x128xf32>
    %184 = vector.extract_strided_slice %173 {offsets = [2, 0], sizes = [1, 256], strides = [1, 1]} : vector<3x256xf32> to vector<1x256xf32>
    %c2_78 = arith.constant 2 : index
    %c0_79 = arith.constant 0 : index
    %c0_80 = arith.constant 0 : index
    %185 = vector.load %arg6[%c2_78, %c0_79, %c0_80] : memref<3x256x128xf32, #tpu.memory_space<vmem>>, vector<1x256x128xf32>
    %186 = vector.shape_cast %185 : vector<1x256x128xf32> to vector<256x128xf32>
    %cst_81 = arith.constant dense<0.000000e+00> : vector<1x128xf32>
    %187 = tpu.matmul %184, %186, %cst_81 {dimension_numbers = #tpu.dot_dimension_numbers<[1], [0], [0], [1], [0, 0, 1, 1], [], []>} : vector<1x256xf32>, vector<256x128xf32>, vector<1x128xf32> -> vector<1x128xf32>
    %188 = arith.addf %183, %187 : vector<1x128xf32>
    %c0_82 = arith.constant 0 : index
    %c0_83 = arith.constant 0 : index
    %189 = vector.load %arg7[%c0_82, %c0_83] : memref<1x128xf32, #tpu.memory_space<vmem>>, vector<1x128xf32>
    %190 = arith.addf %188, %189 : vector<1x128xf32>
    %c0_84 = arith.constant 0 : index
    %c0_85 = arith.constant 0 : index
    %191 = vector.load %arg11[%c0_84, %c0_85] : memref<1x128xf32, #tpu.memory_space<vmem>>, vector<1x128xf32>
    tpu.vector_store %arg11[%c0_84, %c0_85], %190 {strides = array<i32>} : memref<1x128xf32, #tpu.memory_space<vmem>>, vector<1x128xf32>,
    return
  }
}

</mosaic_0001>

<llo_original>
// kernel: tpu_custom_call.1
$region0: #{tpu_custom_call.1}
  #allocation0 [shape = 'u32[]', space=smem, size = 0x4, offset = 0x4, fixed_abs, tag = 'smem constant byte address 0x4 - core index']
  #allocation1 [shape = 'u32[144,128]{1,0:T(1,128)}', space=vmem, size = 0x12000, scoped, tag = 'internal scratch']
  %s0 = inlined_call_operand.vmem [shape: f32[3,9], index: 0, kind: input, shape index: {}]
  %s1 = inlined_call_operand.vmem [shape: f32[3,256], index: 1, kind: input, shape index: {}]
  %s2 = inlined_call_operand.vmem [shape: f32[1,256], index: 2, kind: input, shape index: {}]
  %s3 = inlined_call_operand.vmem [shape: f32[1,256], index: 3, kind: input, shape index: {}]
  %s4 = inlined_call_operand.vmem [shape: f32[3,1], index: 4, kind: input, shape index: {}]
  %s5 = inlined_call_operand.vmem [shape: f32[3,1], index: 5, kind: input, shape index: {}]
  %s6 = inlined_call_operand.hbm [shape: f32[3,256,128], index: 6, kind: input, shape index: {}]
  %s7 = inlined_call_operand.vmem [shape: f32[1,128], index: 7, kind: input, shape index: {}]
  %s8 = inlined_call_operand.hbm [shape: f32[1,256], index: 8, kind: output, shape index: {0}]
  %s9 = inlined_call_operand.hbm [shape: f32[3,256], index: 9, kind: output, shape index: {1}]
  %s10 = inlined_call_operand.hbm [shape: f32[3,256], index: 10, kind: output, shape index: {2}]
  %s11 = inlined_call_operand.hbm [shape: f32[1,128], index: 11, kind: output, shape index: {3}]
  %12 = xla_tuple %s8, %s9, %s10, %s11
  %s13 = sld [smem:[#allocation0]]
  $region74: #{tpu_custom_call.1} parent=0
    _
  %s15 = ssub.s32 1, %s13
  %s16 = scalar_select 0, %s15, %s13
  $region1: #{tpu_custom_call.1} parent=0
    #allocation2 [shape = 'u8[2048]{0}', space=smem, size = 0x800, scoped, tag = 'input window, operand 0, single buffered']
    #allocation3 [shape = 's32[1]{0}', space=sflag, size = 0x4, scoped, tag = 'scoped memory for tpu_custom_call.1']
    #allocation4 [shape = 's32[1]{0}', space=sflag, size = 0x4, scoped, tag = 'scoped memory for tpu_custom_call.1']
    #allocation5 [shape = 's32[1]{0}', space=sflag, size = 0x4, scoped, tag = 'scoped memory for tpu_custom_call.1']
    #allocation6 [shape = 'u8[393216]{0}', space=vmem, size = 0x60000, scoped, tag = 'input window, operand 6, single buffered']
    #allocation7 [shape = 'u8[1024]{0}', space=vmem, size = 0x400, scoped, tag = 'output window, operand 0, single buffered']
    #allocation8 [shape = 'u8[4096]{0}', space=vmem, size = 0x1000, scoped, tag = 'output window, operand 1, single buffered']
    #allocation9 [shape = 's32[1]{0}', space=sflag, size = 0x4, scoped, tag = 'scoped memory for tpu_custom_call.1']
    #allocation10 [shape = 'u8[4096]{0}', space=vmem, size = 0x1000, scoped, tag = 'output window, operand 2, single buffered']
    #allocation11 [shape = 'u8[512]{0}', space=vmem, size = 0x400, scoped, tag = 'output window, operand 3, single buffered']
    #allocation12 [shape = 's32[1]{0}', space=sflag, size = 0x4, scoped, tag = 'scoped memory for tpu_custom_call.1']
    %17 = vsyncpa [#allocation5], 0
    %18 = vsyncpa [#allocation3], 0
    %19 = vsyncpa [#allocation4], 0
    %20 = vsyncpa [#allocation9], 0
    %21 = vsyncpa [#allocation12], 0
    // Predicated region
    $region2: #{tpu_custom_call.1} parent=1 // pred_check
      _
    $region3: #{tpu_custom_call.1} parent=1 // pred_check_branch
      %23 = sbr.rel (0) target = $region5
    $region4: #{tpu_custom_call.1} parent=1 // pred_region
      %s25 = ssub.s32 64, 64
      %26 = vsyncadd [#allocation5], %s25
      %s28 = sshll.u32 %s0, 4
      %s29 = int_to_ptr.vmem [resolvable:$true] %s28
      %31 = dma.vmem_to_smem %s29, 64, [#allocation2], [#allocation5]
    $region5: #{tpu_custom_call.1} parent=1 // pred_fallthru
      _
    // Predicated region
    $region6: #{tpu_custom_call.1} parent=1 // pred_check
      _
    $region7: #{tpu_custom_call.1} parent=1 // pred_check_branch
      %33 = sbr.rel (0) target = $region9
    $region8: #{tpu_custom_call.1} parent=1 // pred_region
      _
    $region9: #{tpu_custom_call.1} parent=1 // pred_fallthru
      _
    // Predicated region
    $region10: #{tpu_custom_call.1} parent=1 // pred_check
      _
    $region11: #{tpu_custom_call.1} parent=1 // pred_check_branch
      %35 = sbr.rel (0) target = $region13
    $region12: #{tpu_custom_call.1} parent=1 // pred_region
      _
    $region13: #{tpu_custom_call.1} parent=1 // pred_fallthru
      _
    // Predicated region
    $region14: #{tpu_custom_call.1} parent=1 // pred_check
      _
    $region15: #{tpu_custom_call.1} parent=1 // pred_check_branch
      %37 = sbr.rel (0) target = $region17
    $region16: #{tpu_custom_call.1} parent=1 // pred_region
      _
    $region17: #{tpu_custom_call.1} parent=1 // pred_fallthru
      _
    // Predicated region
    $region18: #{tpu_custom_call.1} parent=1 // pred_check
      _
    $region19: #{tpu_custom_call.1} parent=1 // pred_check_branch
      %39 = sbr.rel (0) target = $region21
    $region20: #{tpu_custom_call.1} parent=1 // pred_region
      _
    $region21: #{tpu_custom_call.1} parent=1 // pred_fallthru
      _
    // Predicated region
    $region22: #{tpu_custom_call.1} parent=1 // pred_check
      _
    $region23: #{tpu_custom_call.1} parent=1 // pred_check_branch
      %41 = sbr.rel (0) target = $region25
    $region24: #{tpu_custom_call.1} parent=1 // pred_region
      _
    $region25: #{tpu_custom_call.1} parent=1 // pred_fallthru
      _
    // Predicated region
    $region26: #{tpu_custom_call.1} parent=1 // pred_check
      _
    $region27: #{tpu_custom_call.1} parent=1 // pred_check_branch
      %43 = sbr.rel (0) target = $region29
    $region28: #{tpu_custom_call.1} parent=1 // pred_region
      %s45 = ssub.s32 12288, 12288
      %46 = vsyncadd [#allocation3], %s45
      %s47 = sshll.u32 [#allocation6], 4
      %s48 = int_to_ptr.vmem [resolvable:$true] %s47
      %53 = dma.hbm_to_vmem [thread:$0]  %s6, 12288, %s48, [#allocation3], 128, 128, 8
    $region29: #{tpu_custom_call.1} parent=1 // pred_fallthru
      _
    // Predicated region
    $region30: #{tpu_custom_call.1} parent=1 // pred_check
      _
    $region31: #{tpu_custom_call.1} parent=1 // pred_check_branch
      %55 = sbr.rel (0) target = $region33
    $region32: #{tpu_custom_call.1} parent=1 // pred_region
      _
    $region33: #{tpu_custom_call.1} parent=1 // pred_fallthru
      _
    // Predicated region
    $region34: #{tpu_custom_call.1} parent=1 // pred_check
      _
    $region35: #{tpu_custom_call.1} parent=1 // pred_check_branch
      %57 = sbr.rel (0) target = $region37
    $region36: #{tpu_custom_call.1} parent=1 // pred_region
      %58 = dma.done [#allocation5], 64
    $region37: #{tpu_custom_call.1} parent=1 // pred_fallthru
      _
    // Predicated region
    $region38: #{tpu_custom_call.1} parent=1 // pred_check
      _
    $region39: #{tpu_custom_call.1} parent=1 // pred_check_branch
      %60 = sbr.rel (0) target = $region41
    $region40: #{tpu_custom_call.1} parent=1 // pred_region
      %61 = dma.done [#allocation3], 12288
    $region41: #{tpu_custom_call.1} parent=1 // pred_fallthru
      _
    %62 = sfence
    %v63 = vld [vmem:[%s2] sm:$0x3]
    %v64 = vld [vmem:[%s3] sm:$0x3]
    %v65 = vld [vmem:[%s1] sm:$0x77]
    %s66 = sld [smem:[#allocation2]]
    %s67 = sld [smem:[#allocation2 + $0x1]]
    %s68 = sld [smem:[#allocation2 + $0x2]]
    %s69 = sld [smem:[#allocation2 + $0x3]]
    %s70 = sld [smem:[#allocation2 + $0x4]]
    %s71 = sld [smem:[#allocation2 + $0x5]]
    %s72 = sld [smem:[#allocation2 + $0x6]]
    %s73 = sld [smem:[#allocation2 + $0x7]]
    %s74 = sld [smem:[#allocation2 + $0x8]]
    %v75 = vstv %s70
    %v76 = vsub.f32 %v63, %v75
    %v77 = vstv %s71
    %v78 = vsub.f32 %v64, %v77
    %v79 = vstv %s66
    %v80 = vmul.f32 %v79, %v76
    %v81 = vstv %s67
    %v82 = vmul.f32 %v81, %v78
    %v83 = vadd.f32 %v80, %v82
    %v84 = vadd.f32 %v83, %v75
    %v85 = vmul.f32 %v79, %v78
    %v86 = vmul.f32 %v81, %v76
    %v87 = vsub.f32 %v85, %v86
    %v88 = vadd.f32 %v87, %v77
    %v89 = vstv %s68
    %v90 = vmul.f32 %v84, %v89
    %v91 = vsub.f32 %v90, %v75
    %v92 = vstv %s69
    %v93 = vmul.f32 %v88, %v92
    %v94 = vsub.f32 %v93, %v77
    %v95 = vmul.f32 %v91, %v91
    %v96 = vstv %s72
    %v97 = vmul.f32 %v95, %v96
    %v98 = vmul.f32 %v94, %v94
    %v99 = vstv %s73
    %v100 = vmul.f32 %v98, %v99
    %v101 = vadd.f32 %v97, %v100
    %v102 = vmul.f32 %v101, -0.49999967
    %v103 = vmul.f32 %v102, 1.442695
    %v104 = vpow.pop %v103
    %v105 = vstv %s74
    %v106 = vmul.f32 %v105, %v104
    %v107 = vadd.f32 %v106, 0.0
    %v109 = vlaneseq
    %v110 = vshrl.u32 %v109, 7
    %v111 = vsub.s32 0, %v110
    %v112 = vrot.slane %v106, %v111
    %v113 = vlaneseq
    %v114 = vshrl.u32 %v113, 7
    %v115 = vsub.s32 1, %v114
    %v116 = vrot.slane %v106, %v115
    %v117 = vcombine.low %v112, %v116
    %v119 = vadd.f32 %v65, %v117
    %v120 = vmax.f32 %v119, 0.0
    %v121 = vmin.f32 %v120, 1.0
    %s122 = sld [smem:[#allocation2 + $0x80]]
    %s123 = sld [smem:[#allocation2 + $0x81]]
    %s124 = sld [smem:[#allocation2 + $0x82]]
    %s125 = sld [smem:[#allocation2 + $0x83]]
    %s126 = sld [smem:[#allocation2 + $0x84]]
    %s127 = sld [smem:[#allocation2 + $0x85]]
    %s128 = sld [smem:[#allocation2 + $0x86]]
    %s129 = sld [smem:[#allocation2 + $0x87]]
    %s130 = sld [smem:[#allocation2 + $0x88]]
    %v131 = vstv %s126
    %v132 = vsub.f32 %v63, %v131
    %v133 = vstv %s127
    %v134 = vsub.f32 %v64, %v133
    %v135 = vstv %s122
    %v136 = vmul.f32 %v135, %v132
    %v137 = vstv %s123
    %v138 = vmul.f32 %v137, %v134
    %v139 = vadd.f32 %v136, %v138
    %v140 = vadd.f32 %v139, %v131
    %v141 = vmul.f32 %v135, %v134
    %v142 = vmul.f32 %v137, %v132
    %v143 = vsub.f32 %v141, %v142
    %v144 = vadd.f32 %v143, %v133
    %v145 = vstv %s124
    %v146 = vmul.f32 %v140, %v145
    %v147 = vsub.f32 %v146, %v131
    %v148 = vstv %s125
    %v149 = vmul.f32 %v144, %v148
    %v150 = vsub.f32 %v149, %v133
    %v151 = vmul.f32 %v147, %v147
    %v152 = vstv %s128
    %v153 = vmul.f32 %v151, %v152
    %v154 = vmul.f32 %v150, %v150
    %v155 = vstv %s129
    %v156 = vmul.f32 %v154, %v155
    %v157 = vadd.f32 %v153, %v156
    %v158 = vmul.f32 %v157, -0.49999967
    %v159 = vmul.f32 %v158, 1.442695
    %v160 = vpow.pop %v159
    %v161 = vstv %s130
    %v162 = vmul.f32 %v161, %v160
    %v163 = vadd.f32 %v107, %v162
    %v165 = vlaneseq
    %v166 = vshrl.u32 %v165, 7
    %v167 = vsub.s32 0, %v166
    %v168 = vrot.slane %v162, %v167
    %v169 = vlaneseq
    %v170 = vshrl.u32 %v169, 7
    %v171 = vsub.s32 1, %v170
    %v172 = vrot.slane %v162, %v171
    %v173 = vcombine.low %v168, %v172
    %v175 = vadd.f32 %v121, %v173
    %v176 = vmax.f32 %v175, 0.0
    %v177 = vmin.f32 %v176, 1.0
    %s178 = sld [smem:[#allocation2 + $0x100]]
    %s179 = sld [smem:[#allocation2 + $0x101]]
    %s180 = sld [smem:[#allocation2 + $0x102]]
    %s181 = sld [smem:[#allocation2 + $0x103]]
    %s182 = sld [smem:[#allocation2 + $0x104]]
    %s183 = sld [smem:[#allocation2 + $0x105]]
    %s184 = sld [smem:[#allocation2 + $0x106]]
    %s185 = sld [smem:[#allocation2 + $0x107]]
    %s186 = sld [smem:[#allocation2 + $0x108]]
    %v187 = vstv %s182
    %v188 = vsub.f32 %v63, %v187
    %v189 = vstv %s183
    %v190 = vsub.f32 %v64, %v189
    %v191 = vstv %s178
    %v192 = vmul.f32 %v191, %v188
    %v193 = vstv %s179
    %v194 = vmul.f32 %v193, %v190
    %v195 = vadd.f32 %v192, %v194
    %v196 = vadd.f32 %v195, %v187
    %v197 = vmul.f32 %v191, %v190
    %v198 = vmul.f32 %v193, %v188
    %v199 = vsub.f32 %v197, %v198
    %v200 = vadd.f32 %v199, %v189
    %v201 = vstv %s180
    %v202 = vmul.f32 %v196, %v201
    %v203 = vsub.f32 %v202, %v187
    %v204 = vstv %s181
    %v205 = vmul.f32 %v200, %v204
    %v206 = vsub.f32 %v205, %v189
    %v207 = vmul.f32 %v203, %v203
    %v208 = vstv %s184
    %v209 = vmul.f32 %v207, %v208
    %v210 = vmul.f32 %v206, %v206
    %v211 = vstv %s185
    %v212 = vmul.f32 %v210, %v211
    %v213 = vadd.f32 %v209, %v212
    %v214 = vmul.f32 %v213, -0.49999967
    %v215 = vmul.f32 %v214, 1.442695
    %v216 = vpow.pop %v215
    %v217 = vstv %s186
    %v218 = vmul.f32 %v217, %v216
    %v219 = vadd.f32 %v163, %v218
    %v221 = vlaneseq
    %v222 = vshrl.u32 %v221, 7
    %v223 = vsub.s32 0, %v222
    %v224 = vrot.slane %v218, %v223
    %v225 = vlaneseq
    %v226 = vshrl.u32 %v225, 7
    %v227 = vsub.s32 1, %v226
    %v228 = vrot.slane %v218, %v227
    %v229 = vcombine.low %v224, %v228
    %v231 = vadd.f32 %v177, %v229
    %v232 = vmax.f32 %v231, 0.0
    %v233 = vmin.f32 %v232, 1.0
    %v234 = vlaneseq
    %vm235 = vcmp.ge.s32.totalorder %v234, 0
    %vm236 = vcmp.lt.s32.totalorder %v234, 256
    %vm237 = vmand %vm235, %vm236
    %238 = vst.msk [vmem:[#allocation7] sm:$0x3] %vm237, %v219
    %239 = vst [vmem:[#allocation8] sm:$0x77] %v233
    %v240 = vld [vmem:[%s4] sm:$0x7]
    %242 = vset.pattern.permute.xlu0 0
    %243 = vperm.xlu0 %242, %v240
    %v244 = vpop.permute.xlu0 %243
    %v246 = vunpack.c.l.s4 839922192
    %v247 = vunpack.c.0.s8 %v246
    %v248 = vlaneseq
    %v249 = vshrl.u32 %v248, 7
    %v250 = vsub.s32 %v247, %v249
    %v251 = vrot.slane %v244, %v250
    %v253 = vsub.f32 %v233, %v251
    %v254 = vld [vmem:[%s5] sm:$0x7]
    %256 = vset.pattern.permute.xlu0 0
    %257 = vperm.xlu0 %256, %v254
    %v258 = vpop.permute.xlu0 %257
    %v260 = vunpack.c.l.s4 839922192
    %v261 = vunpack.c.0.s8 %v260
    %v262 = vlaneseq
    %v263 = vshrl.u32 %v262, 7
    %v264 = vsub.s32 %v261, %v263
    %v265 = vrot.slane %v258, %v264
    %v267 = vmul.f32 %v253, %v265
    %268 = vst [vmem:[#allocation10] sm:$0x77] %v267
    %v269 = vld [vmem:[#allocation6] sm:$0xff]
    %v270 = vld [vmem:[#allocation6 + $0x8] sm:$0xff]
    %v271 = vld [vmem:[#allocation6 + $0x10] sm:$0xff]
    %v272 = vld [vmem:[#allocation6 + $0x18] sm:$0xff]
    %v273 = vld [vmem:[#allocation6 + $0x20] sm:$0xff]
    %v274 = vld [vmem:[#allocation6 + $0x28] sm:$0xff]
    %v275 = vld [vmem:[#allocation6 + $0x30] sm:$0xff]
    %v276 = vld [vmem:[#allocation6 + $0x38] sm:$0xff]
    %v277 = vld [vmem:[#allocation6 + $0x40] sm:$0xff]
    %v278 = vld [vmem:[#allocation6 + $0x48] sm:$0xff]
    %v279 = vld [vmem:[#allocation6 + $0x50] sm:$0xff]
    %v280 = vld [vmem:[#allocation6 + $0x58] sm:$0xff]
    %v281 = vld [vmem:[#allocation6 + $0x60] sm:$0xff]
    %v282 = vld [vmem:[#allocation6 + $0x68] sm:$0xff]
    %v283 = vld [vmem:[#allocation6 + $0x70] sm:$0xff]
    %v284 = vld [vmem:[#allocation6 + $0x78] sm:$0xff]
    %v285 = vld [vmem:[#allocation6 + $0x80] sm:$0xff]
    %v286 = vld [vmem:[#allocation6 + $0x88] sm:$0xff]
    %v287 = vld [vmem:[#allocation6 + $0x90] sm:$0xff]
    %v288 = vld [vmem:[#allocation6 + $0x98] sm:$0xff]
    %v289 = vld [vmem:[#allocation6 + $0xa0] sm:$0xff]
    %v290 = vld [vmem:[#allocation6 + $0xa8] sm:$0xff]
    %v291 = vld [vmem:[#allocation6 + $0xb0] sm:$0xff]
    %v292 = vld [vmem:[#allocation6 + $0xb8] sm:$0xff]
    %v293 = vld [vmem:[#allocation6 + $0xc0] sm:$0xff]
    %v294 = vld [vmem:[#allocation6 + $0xc8] sm:$0xff]
    %v295 = vld [vmem:[#allocation6 + $0xd0] sm:$0xff]
    %v296 = vld [vmem:[#allocation6 + $0xd8] sm:$0xff]
    %v297 = vld [vmem:[#allocation6 + $0xe0] sm:$0xff]
    %v298 = vld [vmem:[#allocation6 + $0xe8] sm:$0xff]
    %v299 = vld [vmem:[#allocation6 + $0xf0] sm:$0xff]
    %v300 = vld [vmem:[#allocation6 + $0xf8] sm:$0xff]
    %s301 = scalar_lea.vmem [#allocation6], 256
    %v302 = vld [vmem:[%s301] sm:$0xff]
    %v303 = vld [vmem:[%s301 + $0x8] sm:$0xff]
    %v304 = vld [vmem:[%s301 + $0x10] sm:$0xff]
    %v305 = vld [vmem:[%s301 + $0x18] sm:$0xff]
    %v306 = vld [vmem:[%s301 + $0x20] sm:$0xff]
    %v307 = vld [vmem:[%s301 + $0x28] sm:$0xff]
    %v308 = vld [vmem:[%s301 + $0x30] sm:$0xff]
    %v309 = vld [vmem:[%s301 + $0x38] sm:$0xff]
    %v310 = vld [vmem:[%s301 + $0x40] sm:$0xff]
    %v311 = vld [vmem:[%s301 + $0x48] sm:$0xff]
    %v312 = vld [vmem:[%s301 + $0x50] sm:$0xff]
    %v313 = vld [vmem:[%s301 + $0x58] sm:$0xff]
    %v314 = vld [vmem:[%s301 + $0x60] sm:$0xff]
    %v315 = vld [vmem:[%s301 + $0x68] sm:$0xff]
    %v316 = vld [vmem:[%s301 + $0x70] sm:$0xff]
    %v317 = vld [vmem:[%s301 + $0x78] sm:$0xff]
    %v318 = vld [vmem:[%s301 + $0x80] sm:$0xff]
    %v319 = vld [vmem:[%s301 + $0x88] sm:$0xff]
    %v320 = vld [vmem:[%s301 + $0x90] sm:$0xff]
    %v321 = vld [vmem:[%s301 + $0x98] sm:$0xff]
    %v322 = vld [vmem:[%s301 + $0xa0] sm:$0xff]
    %v323 = vld [vmem:[%s301 + $0xa8] sm:$0xff]
    %v324 = vld [vmem:[%s301 + $0xb0] sm:$0xff]
    %v325 = vld [vmem:[%s301 + $0xb8] sm:$0xff]
    %v326 = vld [vmem:[%s301 + $0xc0] sm:$0xff]
    %v327 = vld [vmem:[%s301 + $0xc8] sm:$0xff]
    %v328 = vld [vmem:[%s301 + $0xd0] sm:$0xff]
    %v329 = vld [vmem:[%s301 + $0xd8] sm:$0xff]
    %v330 = vld [vmem:[%s301 + $0xe0] sm:$0xff]
    %v331 = vld [vmem:[%s301 + $0xe8] sm:$0xff]
    %v332 = vld [vmem:[%s301 + $0xf0] sm:$0xff]
    %v333 = vld [vmem:[%s301 + $0xf8] sm:$0xff]
    %v335 = vlaneseq
    %v336 = vshrl.u32 %v335, 7
    %v337 = vsub.s32 1, %v336
    %v338 = vrot.slane %v267, %v337
    %v339 = vlaneseq
    %v340 = vshrl.u32 %v339, 7
    %v341 = vsub.s32 5, %v340
    %v342 = vrot.slane %v267, %v341
    %345 = vmatprep.subr.mxu0 0.0
    %346 = vmatpush1.msra.mxu0 %v302
    %347 = vmatprep.subr.mxu0 0.0
    %348 = vmatpush1.msra.mxu0 %v303
    %349 = vmatprep.subr.mxu0 0.0
    %350 = vmatpush1.msra.mxu0 %v304
    %351 = vmatprep.subr.mxu0 0.0
    %352 = vmatpush1.msra.mxu0 %v305
    %353 = vmatprep.subr.mxu0 0.0
    %354 = vmatpush1.msra.mxu0 %v306
    %355 = vmatprep.subr.mxu0 0.0
    %356 = vmatpush1.msra.mxu0 %v307
    %357 = vmatprep.subr.mxu0 0.0
    %358 = vmatpush1.msra.mxu0 %v308
    %359 = vmatprep.subr.mxu0 0.0
    %360 = vmatpush1.msra.mxu0 %v309
    %361 = vmatprep.subr.mxu0 0.0
    %362 = vmatpush1.msra.mxu0 %v310
    %363 = vmatprep.subr.mxu0 0.0
    %364 = vmatpush1.msra.mxu0 %v311
    %365 = vmatprep.subr.mxu0 0.0
    %366 = vmatpush1.msra.mxu0 %v312
    %367 = vmatprep.subr.mxu0 0.0
    %368 = vmatpush1.msra.mxu0 %v313
    %369 = vmatprep.subr.mxu0 0.0
    %370 = vmatpush1.msra.mxu0 %v314
    %371 = vmatprep.subr.mxu0 0.0
    %372 = vmatpush1.msra.mxu0 %v315
    %373 = vmatprep.subr.mxu0 0.0
    %374 = vmatpush1.msra.mxu0 %v316
    %375 = vmatprep.subr.mxu0 0.0
    %376 = vmatpush1.msra.mxu0 %v317
    %377 = vmatprep.subr.mxu0 0.0
    %378 = vmatpush1.msra.mxu0 %v318
    %379 = vmatprep.subr.mxu0 0.0
    %380 = vmatpush1.msra.mxu0 %v319
    %381 = vmatprep.subr.mxu0 0.0
    %382 = vmatpush1.msra.mxu0 %v320
    %383 = vmatprep.subr.mxu0 0.0
    %384 = vmatpush1.msra.mxu0 %v321
    %385 = vmatprep.subr.mxu0 0.0
    %386 = vmatpush1.msra.mxu0 %v322
    %387 = vmatprep.subr.mxu0 0.0
    %388 = vmatpush1.msra.mxu0 %v323
    %389 = vmatprep.subr.mxu0 0.0
    %390 = vmatpush1.msra.mxu0 %v324
    %391 = vmatprep.subr.mxu0 0.0
    %392 = vmatpush1.msra.mxu0 %v325
    %393 = vmatprep.subr.mxu0 0.0
    %394 = vmatpush1.msra.mxu0 %v326
    %395 = vmatprep.subr.mxu0 0.0
    %396 = vmatpush1.msra.mxu0 %v327
    %397 = vmatprep.subr.mxu0 0.0
    %398 = vmatpush1.msra.mxu0 %v328
    %399 = vmatprep.subr.mxu0 0.0
    %400 = vmatpush1.msra.mxu0 %v329
    %401 = vmatprep.subr.mxu0 0.0
    %402 = vmatpush1.msra.mxu0 %v330
    %403 = vmatprep.subr.mxu0 0.0
    %404 = vmatpush1.msra.mxu0 %v331
    %405 = vmatprep.subr.mxu0 0.0
    %406 = vmatpush1.msra.mxu0 %v332
    %407 = vmatprep.subr.mxu0 0.0
    %408 = vmatpush1.msra.mxu0 %v333
    %409 = vmatprep.mubr.f32.mxu0 %v342
    %410 = vmatmul.mubr.f32.gmra.mrb[0].mxu0 %v338
    %v411 = vpop.f32.mrb[0].mxu0
    %v412 = vadd.f32 0.0, %v411
    %v413 = vpop.f32.mrb[0].mxu0
    %414 = vdwg.mxu0
    %v415 = vlaneseq
    %v416 = vshrl.u32 %v415, 7
    %v417 = vsub.s32 0, %v416
    %v418 = vrot.slane %v267, %v417
    %v419 = vlaneseq
    %v420 = vshrl.u32 %v419, 7
    %v421 = vsub.s32 4, %v420
    %v422 = vrot.slane %v267, %v421
    %425 = vmatprep.subr.mxu0 0.0
    %426 = vmatpush1.msra.mxu0 %v269
    %427 = vmatprep.subr.mxu0 0.0
    %428 = vmatpush1.msra.mxu0 %v270
    %429 = vmatprep.subr.mxu0 0.0
    %430 = vmatpush1.msra.mxu0 %v271
    %431 = vmatprep.subr.mxu0 0.0
    %432 = vmatpush1.msra.mxu0 %v272
    %433 = vmatprep.subr.mxu0 0.0
    %434 = vmatpush1.msra.mxu0 %v273
    %435 = vmatprep.subr.mxu0 0.0
    %436 = vmatpush1.msra.mxu0 %v274
    %437 = vmatprep.subr.mxu0 0.0
    %438 = vmatpush1.msra.mxu0 %v275
    %439 = vmatprep.subr.mxu0 0.0
    %440 = vmatpush1.msra.mxu0 %v276
    %441 = vmatprep.subr.mxu0 0.0
    %442 = vmatpush1.msra.mxu0 %v277
    %443 = vmatprep.subr.mxu0 0.0
    %444 = vmatpush1.msra.mxu0 %v278
    %445 = vmatprep.subr.mxu0 0.0
    %446 = vmatpush1.msra.mxu0 %v279
    %447 = vmatprep.subr.mxu0 0.0
    %448 = vmatpush1.msra.mxu0 %v280
    %449 = vmatprep.subr.mxu0 0.0
    %450 = vmatpush1.msra.mxu0 %v281
    %451 = vmatprep.subr.mxu0 0.0
    %452 = vmatpush1.msra.mxu0 %v282
    %453 = vmatprep.subr.mxu0 0.0
    %454 = vmatpush1.msra.mxu0 %v283
    %455 = vmatprep.subr.mxu0 0.0
    %456 = vmatpush1.msra.mxu0 %v284
    %457 = vmatprep.subr.mxu0 0.0
    %458 = vmatpush1.msra.mxu0 %v285
    %459 = vmatprep.subr.mxu0 0.0
    %460 = vmatpush1.msra.mxu0 %v286
    %461 = vmatprep.subr.mxu0 0.0
    %462 = vmatpush1.msra.mxu0 %v287
    %463 = vmatprep.subr.mxu0 0.0
    %464 = vmatpush1.msra.mxu0 %v288
    %465 = vmatprep.subr.mxu0 0.0
    %466 = vmatpush1.msra.mxu0 %v289
    %467 = vmatprep.subr.mxu0 0.0
    %468 = vmatpush1.msra.mxu0 %v290
    %469 = vmatprep.subr.mxu0 0.0
    %470 = vmatpush1.msra.mxu0 %v291
    %471 = vmatprep.subr.mxu0 0.0
    %472 = vmatpush1.msra.mxu0 %v292
    %473 = vmatprep.subr.mxu0 0.0
    %474 = vmatpush1.msra.mxu0 %v293
    %475 = vmatprep.subr.mxu0 0.0
    %476 = vmatpush1.msra.mxu0 %v294
    %477 = vmatprep.subr.mxu0 0.0
    %478 = vmatpush1.msra.mxu0 %v295
    %479 = vmatprep.subr.mxu0 0.0
    %480 = vmatpush1.msra.mxu0 %v296
    %481 = vmatprep.subr.mxu0 0.0
    %482 = vmatpush1.msra.mxu0 %v297
    %483 = vmatprep.subr.mxu0 0.0
    %484 = vmatpush1.msra.mxu0 %v298
    %485 = vmatprep.subr.mxu0 0.0
    %486 = vmatpush1.msra.mxu0 %v299
    %487 = vmatprep.subr.mxu0 0.0
    %488 = vmatpush1.msra.mxu0 %v300
    %489 = vmatprep.mubr.f32.mxu0 %v422
    %490 = vmatmul.mubr.f32.gmra.mrb[0].mxu0 %v418
    %v491 = vpop.f32.mrb[0].mxu0
    %v492 = vadd.f32 %v412, %v491
    %v493 = vpop.f32.mrb[0].mxu0
    %494 = vdwg.mxu0
    %s495 = scalar_lea.vmem [#allocation6], 512
    %v496 = vld [vmem:[%s495] sm:$0xff]
    %v497 = vld [vmem:[%s495 + $0x8] sm:$0xff]
    %v498 = vld [vmem:[%s495 + $0x10] sm:$0xff]
    %v499 = vld [vmem:[%s495 + $0x18] sm:$0xff]
    %v500 = vld [vmem:[%s495 + $0x20] sm:$0xff]
    %v501 = vld [vmem:[%s495 + $0x28] sm:$0xff]
    %v502 = vld [vmem:[%s495 + $0x30] sm:$0xff]
    %v503 = vld [vmem:[%s495 + $0x38] sm:$0xff]
    %v504 = vld [vmem:[%s495 + $0x40] sm:$0xff]
    %v505 = vld [vmem:[%s495 + $0x48] sm:$0xff]
    %v506 = vld [vmem:[%s495 + $0x50] sm:$0xff]
    %v507 = vld [vmem:[%s495 + $0x58] sm:$0xff]
    %v508 = vld [vmem:[%s495 + $0x60] sm:$0xff]
    %v509 = vld [vmem:[%s495 + $0x68] sm:$0xff]
    %v510 = vld [vmem:[%s495 + $0x70] sm:$0xff]
    %v511 = vld [vmem:[%s495 + $0x78] sm:$0xff]
    %v512 = vld [vmem:[%s495 + $0x80] sm:$0xff]
    %v513 = vld [vmem:[%s495 + $0x88] sm:$0xff]
    %v514 = vld [vmem:[%s495 + $0x90] sm:$0xff]
    %v515 = vld [vmem:[%s495 + $0x98] sm:$0xff]
    %v516 = vld [vmem:[%s495 + $0xa0] sm:$0xff]
    %v517 = vld [vmem:[%s495 + $0xa8] sm:$0xff]
    %v518 = vld [vmem:[%s495 + $0xb0] sm:$0xff]
    %v519 = vld [vmem:[%s495 + $0xb8] sm:$0xff]
    %v520 = vld [vmem:[%s495 + $0xc0] sm:$0xff]
    %v521 = vld [vmem:[%s495 + $0xc8] sm:$0xff]
    %v522 = vld [vmem:[%s495 + $0xd0] sm:$0xff]
    %v523 = vld [vmem:[%s495 + $0xd8] sm:$0xff]
    %v524 = vld [vmem:[%s495 + $0xe0] sm:$0xff]
    %v525 = vld [vmem:[%s495 + $0xe8] sm:$0xff]
    %v526 = vld [vmem:[%s495 + $0xf0] sm:$0xff]
    %v527 = vld [vmem:[%s495 + $0xf8] sm:$0xff]
    %v528 = vlaneseq
    %v529 = vshrl.u32 %v528, 7
    %v530 = vsub.s32 2, %v529
    %v531 = vrot.slane %v267, %v530
    %v532 = vlaneseq
    %v533 = vshrl.u32 %v532, 7
    %v534 = vsub.s32 6, %v533
    %v535 = vrot.slane %v267, %v534
    %538 = vmatprep.subr.mxu0 0.0
    %539 = vmatpush1.msra.mxu0 %v496
    %540 = vmatprep.subr.mxu0 0.0
    %541 = vmatpush1.msra.mxu0 %v497
    %542 = vmatprep.subr.mxu0 0.0
    %543 = vmatpush1.msra.mxu0 %v498
    %544 = vmatprep.subr.mxu0 0.0
    %545 = vmatpush1.msra.mxu0 %v499
    %546 = vmatprep.subr.mxu0 0.0
    %547 = vmatpush1.msra.mxu0 %v500
    %548 = vmatprep.subr.mxu0 0.0
    %549 = vmatpush1.msra.mxu0 %v501
    %550 = vmatprep.subr.mxu0 0.0
    %551 = vmatpush1.msra.mxu0 %v502
    %552 = vmatprep.subr.mxu0 0.0
    %553 = vmatpush1.msra.mxu0 %v503
    %554 = vmatprep.subr.mxu0 0.0
    %555 = vmatpush1.msra.mxu0 %v504
    %556 = vmatprep.subr.mxu0 0.0
    %557 = vmatpush1.msra.mxu0 %v505
    %558 = vmatprep.subr.mxu0 0.0
    %559 = vmatpush1.msra.mxu0 %v506
    %560 = vmatprep.subr.mxu0 0.0
    %561 = vmatpush1.msra.mxu0 %v507
    %562 = vmatprep.subr.mxu0 0.0
    %563 = vmatpush1.msra.mxu0 %v508
    %564 = vmatprep.subr.mxu0 0.0
    %565 = vmatpush1.msra.mxu0 %v509
    %566 = vmatprep.subr.mxu0 0.0
    %567 = vmatpush1.msra.mxu0 %v510
    %568 = vmatprep.subr.mxu0 0.0
    %569 = vmatpush1.msra.mxu0 %v511
    %570 = vmatprep.subr.mxu0 0.0
    %571 = vmatpush1.msra.mxu0 %v512
    %572 = vmatprep.subr.mxu0 0.0
    %573 = vmatpush1.msra.mxu0 %v513
    %574 = vmatprep.subr.mxu0 0.0
    %575 = vmatpush1.msra.mxu0 %v514
    %576 = vmatprep.subr.mxu0 0.0
    %577 = vmatpush1.msra.mxu0 %v515
    %578 = vmatprep.subr.mxu0 0.0
    %579 = vmatpush1.msra.mxu0 %v516
    %580 = vmatprep.subr.mxu0 0.0
    %581 = vmatpush1.msra.mxu0 %v517
    %582 = vmatprep.subr.mxu0 0.0
    %583 = vmatpush1.msra.mxu0 %v518
    %584 = vmatprep.subr.mxu0 0.0
    %585 = vmatpush1.msra.mxu0 %v519
    %586 = vmatprep.subr.mxu0 0.0
    %587 = vmatpush1.msra.mxu0 %v520
    %588 = vmatprep.subr.mxu0 0.0
    %589 = vmatpush1.msra.mxu0 %v521
    %590 = vmatprep.subr.mxu0 0.0
    %591 = vmatpush1.msra.mxu0 %v522
    %592 = vmatprep.subr.mxu0 0.0
    %593 = vmatpush1.msra.mxu0 %v523
    %594 = vmatprep.subr.mxu0 0.0
    %595 = vmatpush1.msra.mxu0 %v524
    %596 = vmatprep.subr.mxu0 0.0
    %597 = vmatpush1.msra.mxu0 %v525
    %598 = vmatprep.subr.mxu0 0.0
    %599 = vmatpush1.msra.mxu0 %v526
    %600 = vmatprep.subr.mxu0 0.0
    %601 = vmatpush1.msra.mxu0 %v527
    %602 = vmatprep.mubr.f32.mxu0 %v535
    %603 = vmatmul.mubr.f32.gmra.mrb[0].mxu0 %v531
    %v604 = vpop.f32.mrb[0].mxu0
    %v605 = vadd.f32 0.0, %v604
    %v606 = vpop.f32.mrb[0].mxu0
    %607 = vdwg.mxu0
    %v608 = vadd.f32 %v492, %v605
    %v609 = vld [vmem:[%s7] sm:$0x1]
    %v610 = vadd.f32 %v608, %v609
    %611 = vst [vmem:[#allocation11] sm:$0x1] %v610
    // Predicated region
    $region42: #{tpu_custom_call.1} parent=1 // pred_check
      _
    $region43: #{tpu_custom_call.1} parent=1 // pred_check_branch
      %613 = sbr.rel (0) target = $region45
    $region44: #{tpu_custom_call.1} parent=1 // pred_region
      %s615 = ssub.s32 32, 32
      %616 = vsyncadd [#allocation4], %s615
      %s618 = sshll.u32 [#allocation7], 4
      %s619 = int_to_ptr.vmem [resolvable:$true] %s618
      %621 = dma.vmem_to_hbm [thread:$0]  %s619, 32, %s8, [#allocation4]
    $region45: #{tpu_custom_call.1} parent=1 // pred_fallthru
      _
    // Predicated region
    $region46: #{tpu_custom_call.1} parent=1 // pred_check
      _
    $region47: #{tpu_custom_call.1} parent=1 // pred_check_branch
      %623 = sbr.rel (0) target = $region49
    $region48: #{tpu_custom_call.1} parent=1 // pred_region
      %s625 = ssub.s32 128, 128
      %626 = vsyncadd [#allocation9], %s625
      %s628 = sshll.u32 [#allocation8], 4
      %s629 = int_to_ptr.vmem [resolvable:$true] %s628
      %631 = dma.vmem_to_hbm [thread:$0]  %s629, 128, %s9, [#allocation9]
    $region49: #{tpu_custom_call.1} parent=1 // pred_fallthru
      _
    // Predicated region
    $region50: #{tpu_custom_call.1} parent=1 // pred_check
      _
    $region51: #{tpu_custom_call.1} parent=1 // pred_check_branch
      %633 = sbr.rel (0) target = $region53
    $region52: #{tpu_custom_call.1} parent=1 // pred_region
      %s635 = ssub.s32 128, 128
      %636 = vsyncadd [#allocation9], %s635
      %s638 = sshll.u32 [#allocation10], 4
      %s639 = int_to_ptr.vmem [resolvable:$true] %s638
      %641 = dma.vmem_to_hbm [thread:$0]  %s639, 128, %s10, [#allocation9]
    $region53: #{tpu_custom_call.1} parent=1 // pred_fallthru
      _
    // Predicated region
    $region54: #{tpu_custom_call.1} parent=1 // pred_check
      _
    $region55: #{tpu_custom_call.1} parent=1 // pred_check_branch
      %643 = sbr.rel (0) target = $region57
    $region56: #{tpu_custom_call.1} parent=1 // pred_region
      %s645 = ssub.s32 16, 16
      %646 = vsyncadd [#allocation12], %s645
      %s648 = sshll.u32 [#allocation11], 4
      %s649 = int_to_ptr.vmem [resolvable:$true] %s648
      %651 = dma.vmem_to_hbm [thread:$0]  %s649, 16, %s11, [#allocation12]
    $region57: #{tpu_custom_call.1} parent=1 // pred_fallthru
      _
    // Predicated region
    $region58: #{tpu_custom_call.1} parent=1 // pred_check
      _
    $region59: #{tpu_custom_call.1} parent=1 // pred_check_branch
      %653 = sbr.rel (0) target = $region61
    $region60: #{tpu_custom_call.1} parent=1 // pred_region
      %654 = dma.done [#allocation4], 32
    $region61: #{tpu_custom_call.1} parent=1 // pred_fallthru
      _
    // Predicated region
    $region62: #{tpu_custom_call.1} parent=1 // pred_check
      _
    $region63: #{tpu_custom_call.1} parent=1 // pred_check_branch
      %656 = sbr.rel (0) target = $region65
    $region64: #{tpu_custom_call.1} parent=1 // pred_region
      %657 = dma.done [#allocation9], 128
    $region65: #{tpu_custom_call.1} parent=1 // pred_fallthru
      _
    // Predicated region
    $region66: #{tpu_custom_call.1} parent=1 // pred_check
      _
    $region67: #{tpu_custom_call.1} parent=1 // pred_check_branch
      %659 = sbr.rel (0) target = $region69
    $region68: #{tpu_custom_call.1} parent=1 // pred_region
      %660 = dma.done [#allocation9], 128
    $region69: #{tpu_custom_call.1} parent=1 // pred_fallthru
      _
    // Predicated region
    $region70: #{tpu_custom_call.1} parent=1 // pred_check
      _
    $region71: #{tpu_custom_call.1} parent=1 // pred_check_branch
      %662 = sbr.rel (0) target = $region73
    $region72: #{tpu_custom_call.1} parent=1 // pred_region
      %663 = dma.done [#allocation12], 16
    $region73: #{tpu_custom_call.1} parent=1 // pred_fallthru
      _
    %664 = vsyncpa [#allocation3], 1
    %665 = vsyncpa [#allocation4], 1
    %666 = vsyncpa [#allocation9], 1
    %667 = vsyncpa [#allocation12], 1
    %668 = vsyncpa [#allocation5], 1

</llo_original>
